<compile_context>
chip_gen: v7x
topology: tpu7x:2x2x1
jax: 0.10.0
libtpu: 0.0.40
codegen_flags: <defaults>
</compile_context>

<pallas_src>
import functools

import jax
import jax.numpy as jnp
from jax.experimental import pallas as pl
from jax.experimental.pallas import tpu as pltpu


_VMEM_BUDGET = 24 * 1024 * 1024   # per-step working-set target (fits v7x 64 MiB)
_VMEM_LIMIT = 48 * 1024 * 1024    # explicit scoped-VMEM limit (> 32 MiB default,
                                  # still well under v7x's 64 MiB physical)


def _round_up(x, m):
    return ((x + m - 1) // m) * m


def _cdiv(a, b):
    return -(-a // b)


# --------------------------------------------------------------------------- #
# Kernels
# --------------------------------------------------------------------------- #
def _conv_mxu_kernel(x_ref, w_ref, b_ref, o_ref, slab_ref, *, taps, apply_relu):
    """One (batch, pixel-tile) grid step, MXU path.

    x_ref   : (1, 1, C_in, TP + max_off)  halo'd input tile (compute dtype)
    w_ref   : (C_out, KH*KW*C_in)         folded weights (compute dtype), resident
    b_ref   : (C_out, 1)                  folded bias (f32), resident
    o_ref   : (1, C_out, TP)              output tile (lane-dense)
    slab_ref: (KH*KW*C_in, TP)            VMEM im2col scratch
    """
    c_in = x_ref.shape[2]
    tp = o_ref.shape[2]

    # Build the im2col slab: one shifted window per tap, stacked on sublanes.
    for k, off in enumerate(taps):
        slab_ref[k * c_in:(k + 1) * c_in, :] = x_ref[0, 0, :, off:off + tp]

    # Single MXU matmul with K = KH*KW*C_in (instead of KH*KW tiny-K matmuls).
    acc = jnp.dot(w_ref[...], slab_ref[...],
                  preferred_element_type=jnp.float32)     # (C_out, TP) f32
    acc = acc + b_ref[...]                                # bias bcast over lanes
    if apply_relu:
        acc = jnp.maximum(acc, 0.0)
    o_ref[0] = acc.astype(o_ref.dtype)


def _conv_vpu_kernel(w_ref, b_ref, x_ref, o_ref, *, taps, apply_relu):
    """One (batch, pixel-tile) grid step, VPU path for tiny channel counts.

    w_ref: (KH*KW*C_out*C_in,) f32 in SMEM (scalar weights)
    b_ref: (C_out,)            f32 in SMEM
    x_ref: (1, 1, C_in, TP + max_off)     halo'd input tile
    o_ref: (1, C_out, TP)
    """
    c_in = x_ref.shape[2]
    c_out = o_ref.shape[1]
    tp = o_ref.shape[2]

    accs = [jnp.zeros((1, tp), jnp.float32) for _ in range(c_out)]
    for k, off in enumerate(taps):
        x_k = x_ref[0, 0, :, off:off + tp].astype(jnp.float32)   # (C_in, TP)
        for o in range(c_out):
            for c in range(c_in):
                w_sc = w_ref[(k * c_out + o) * c_in + c]          # SMEM scalar
                accs[o] = accs[o] + w_sc * x_k[c:c + 1, :]
    for o in range(c_out):
        y = accs[o] + b_ref[o]
        if apply_relu:
            y = jnp.maximum(y, 0.0)
        o_ref[0, o:o + 1, :] = y.astype(o_ref.dtype)


# --------------------------------------------------------------------------- #
# Host-side wrapper
# --------------------------------------------------------------------------- #
def _fold_conv_bn(params, *, bias, bn, eps=1e-5):
    """Fold (optional) conv bias and eval-mode BatchNorm into W, b."""
    w = params["w"].astype(jnp.float32)                    # (C_out, C_in, KH, KW)
    c_out = w.shape[0]
    b = (params["b"].astype(jnp.float32) if bias
         else jnp.zeros((c_out,), jnp.float32))
    if bn:
        scale = params["bn_gamma"] / jnp.sqrt(params["bn_var"] + eps)
        w = w * scale[:, None, None, None]
        b = (b - params["bn_mean"]) * scale + params["bn_beta"]
    return w, b


def _choose_tile(p_valid, max_off, c_in, c_out, k_total, in_bytes, out_bytes,
                 tile_pixels):
    """Largest lane-dense pixel tile whose working set fits the VMEM budget."""
    tp = min(_round_up(max(p_valid, 128), 128), _round_up(tile_pixels, 128))
    while tp > 128:
        est = (2 * c_in * (tp + max_off) * in_bytes      # double-buffered input
               + 2 * c_out * tp * out_bytes              # double-buffered output
               + k_total * tp * in_bytes                 # im2col slab scratch
               + c_out * tp * 4                          # f32 accumulator
               + c_out * k_total * in_bytes)             # resident weights
        if est <= _VMEM_BUDGET:
            break
        tp = _round_up(tp // 2, 128)
    return tp


def basic_conv(x, params, *, kernel_size, stride=1, padding=0, dilation=1,
               groups=1, relu=True, bn=True, bias=False, eps=1e-5,
               compute_dtype=jnp.bfloat16, tile_pixels=1024):
    """BasicConv forward on NCHW input x. Returns NCHW output."""
    assert stride == 1, "TODO(synk): stride > 1 not implemented"
    assert groups == 1, "TODO(synk): groups > 1 not implemented"

    if isinstance(kernel_size, int):
        kh = kw = kernel_size
    else:
        kh, kw = kernel_size

    n, c_in, h, w_dim = x.shape
    w_eff, b_eff = _fold_conv_bn(params, bias=bias, bn=bn, eps=eps)
    c_out = w_eff.shape[0]

    h_p = h + 2 * padding
    w_p = w_dim + 2 * padding
    h_out = h_p - dilation * (kh - 1)
    w_out = w_p - dilation * (kw - 1)
    assert h_out > 0 and w_out > 0

    # Output computed in "padded-row" geometry: h_out rows of width w_p (only
    # the first w_out columns of each row are valid); flattened so the pixel
    # axis sits on lanes and every tap is one contiguous shifted window.
    p_valid = h_out * w_p
    max_off = (kh - 1) * dilation * w_p + (kw - 1) * dilation
    k_total = kh * kw * c_in

    in_bytes = jnp.dtype(compute_dtype).itemsize
    out_bytes = jnp.dtype(x.dtype).itemsize
    tp = _choose_tile(p_valid, max_off, c_in, c_out, k_total,
                      in_bytes, out_bytes, tile_pixels)
    num_tiles = _cdiv(p_valid, tp)
    tp_in = tp + max_off                       # halo'd input tile width
    p_flat = num_tiles * tp + max_off          # flat pixels the tiles must cover

    # Single pad: spatial padding + enough extra bottom rows to cover the last
    # tile's halo, then a (free, contiguous) reshape.  No second flat pad.
    rows_total = _cdiv(p_flat, w_p)
    x_pad = jnp.pad(x, ((0, 0), (0, 0),
                        (padding, rows_total - h - padding),
                        (padding, padding)))
    x_flat = x_pad.reshape(n, c_in, rows_total * w_p)

    # Halo'd, overlapping pixel tiles (one fused host-side gather).  Extra HBM
    # traffic is only ~max_off/TP.  TODO(synk): manual halo DMA would avoid it.
    x_tiles = jnp.stack(
        [x_flat[:, :, t * tp: t * tp + tp_in] for t in range(num_tiles)],
        axis=1).astype(compute_dtype)          # (n, num_tiles, c_in, tp_in)

    taps = tuple(ky * dilation * w_p + kx * dilation
                 for ky in range(kh) for kx in range(kw))

    grid = (n, num_tiles)
    x_spec = pl.BlockSpec((1, 1, c_in, tp_in), lambda b, t: (b, t, 0, 0))
    o_spec = pl.BlockSpec((1, c_out, tp), lambda b, t: (b, 0, t))
    out_shape = jax.ShapeDtypeStruct((n, c_out, num_tiles * tp), x.dtype)
    cparams = pltpu.CompilerParams(
        dimension_semantics=("parallel", "parallel"),   # batch x pixel tiles
        vmem_limit_bytes=_VMEM_LIMIT)

    # Tiny channel counts (CBAM spatial gate: c_out=1, c_in=2): the MXU would be
    # <0.01% utilized -- use VPU broadcast FMAs with SMEM scalar weights.
    use_vpu = (c_out * c_in <= 8)

    if use_vpu:
        # weight order: (ky, kx, o, c) -> flat, matching the kernel indexing.
        w_flat = jnp.transpose(w_eff, (2, 3, 0, 1)).reshape(-1)
        kernel = functools.partial(_conv_vpu_kernel, taps=taps, apply_relu=relu)
        out_flat = pl.pallas_call(
            kernel,
            out_shape=out_shape,
            grid_spec=pltpu.PrefetchScalarGridSpec(
                num_scalar_prefetch=0,
                grid=grid,
                in_specs=[
                    pl.BlockSpec(memory_space=pltpu.MemorySpace.SMEM),  # weights
                    pl.BlockSpec(memory_space=pltpu.MemorySpace.SMEM),  # bias
                    x_spec,
                ],
                out_specs=o_spec),
            compiler_params=cparams,
        )(w_flat.astype(jnp.float32), b_eff.astype(jnp.float32), x_tiles)
    else:
        # (C_out, KH*KW*C_in), column order (ky, kx, c) to match the slab rows.
        w2 = jnp.transpose(w_eff, (0, 2, 3, 1)).reshape(c_out, k_total)
        w2 = w2.astype(compute_dtype)
        b_col = b_eff.reshape(c_out, 1).astype(jnp.float32)
        kernel = functools.partial(_conv_mxu_kernel, taps=taps, apply_relu=relu)
        out_flat = pl.pallas_call(
            kernel,
            out_shape=out_shape,
            grid_spec=pltpu.PrefetchScalarGridSpec(
                num_scalar_prefetch=0,
                grid=grid,
                in_specs=[
                    x_spec,
                    pl.BlockSpec((c_out, k_total), lambda b, t: (0, 0)),  # resident
                    pl.BlockSpec((c_out, 1), lambda b, t: (0, 0)),        # resident
                ],
                out_specs=o_spec,
                scratch_shapes=[pltpu.VMEM((k_total, tp), compute_dtype)]),
            compiler_params=cparams,
        )(x_tiles, w2, b_col)

    # Padded-row geometry -> NCHW (pure slice + free reshape, no transpose).
    out = out_flat[:, :, :p_valid].reshape(n, c_out, h_out, w_p)
    return out[:, :, :, :w_out]


# --------------------------------------------------------------------------- #
# Pure-JAX reference + test harness
# --------------------------------------------------------------------------- #
def basic_conv_ref(x, params, *, kernel_size, stride=1, padding=0, dilation=1,
                   relu=True, bn=True, bias=False, eps=1e-5):
    """Pure-JAX reference (eval-mode BN), for correctness checking."""
    if isinstance(kernel_size, int):
        kernel_size = (kernel_size, kernel_size)
    y = jax.lax.conv_general_dilated(
        x, params["w"],
        window_strides=(stride, stride),
        padding=((padding, padding), (padding, padding)),
        rhs_dilation=(dilation, dilation),
        dimension_numbers=("NCHW", "OIHW", "NCHW"))
    if bias:
        y = y + params["b"][None, :, None, None]
    if bn:
        scale = params["bn_gamma"] / jnp.sqrt(params["bn_var"] + eps)
        shift = params["bn_beta"] - params["bn_mean"] * scale
        y = y * scale[None, :, None, None] + shift[None, :, None, None]
    if relu:
        y = jnp.maximum(y, 0.0)
    return y


def make_params(key, c_out, c_in, kh, kw, *, bias, bn):
    k1, k2 = jax.random.split(key)
    p = {"w": 0.5 * jax.random.normal(k1, (c_out, c_in, kh, kw), jnp.float32)}
    if bias:
        p["b"] = 0.1 * jax.random.normal(k2, (c_out,), jnp.float32)
    if bn:
        p["bn_gamma"] = jnp.linspace(0.9, 1.1, c_out, dtype=jnp.float32)
        p["bn_beta"] = jnp.linspace(-0.1, 0.1, c_out, dtype=jnp.float32)
        p["bn_mean"] = jnp.linspace(-0.05, 0.05, c_out, dtype=jnp.float32)
        p["bn_var"] = jnp.linspace(0.8, 1.2, c_out, dtype=jnp.float32)
    return p


if __name__ == "__main__":
    key = jax.random.PRNGKey(0)
    kx_a, kp_a, kx_b, kp_b, kp_c = jax.random.split(key, 5)

    # --- Config A: BasicConv(4, 8, kernel_size=3, padding=1) -- MXU path, bf16.
    cfg_a = dict(kernel_size=3, stride=1, padding=1, dilation=1,
                 relu=True, bn=True, bias=False)
    x_a = jax.random.normal(kx_a, (2, 4, 16, 16), jnp.float32)
    p_a = make_params(kp_a, 8, 4, 3, 3, bias=False, bn=True)
    ref_a = basic_conv_ref(x_a, p_a, **cfg_a)
    out_a16 = jax.block_until_ready(
        basic_conv(x_a, p_a, compute_dtype=jnp.bfloat16, **cfg_a))
    assert out_a16.shape == (2, 8, 16, 16)
    assert jnp.allclose(out_a16, ref_a, atol=1e-1, rtol=2e-2), "A bf16 mismatch"

    # --- Config A variant: f32 compute, conv bias, forced 3 pixel tiles (halo).
    cfg_a2 = dict(kernel_size=3, stride=1, padding=1, dilation=1,
                  relu=True, bn=True, bias=True)
    p_a2 = make_params(kp_c, 8, 4, 3, 3, bias=True, bn=True)
    ref_a2 = basic_conv_ref(x_a, p_a2, **cfg_a2)
    out_a2 = jax.block_until_ready(
        basic_conv(x_a, p_a2, compute_dtype=jnp.float32, tile_pixels=128,
                   **cfg_a2))
    assert out_a2.shape == (2, 8, 16, 16)
    assert jnp.allclose(out_a2, ref_a2, atol=2e-3, rtol=2e-3), \
        "A f32 multi-tile mismatch"

    # --- Config B: CBAM spatial gate BasicConv(2, 1, 7, padding=3, relu=False)
    #     -- tiny channels -> VPU path.
    cfg_b = dict(kernel_size=7, stride=1, padding=3, dilation=1,
                 relu=False, bn=True, bias=False)
    x_b = jax.random.normal(kx_b, (2, 2, 16, 16), jnp.float32)
    p_b = make_params(kp_b, 1, 2, 7, 7, bias=False, bn=True)
    ref_b = basic_conv_ref(x_b, p_b, **cfg_b)
    out_b16 = jax.block_until_ready(
        basic_conv(x_b, p_b, compute_dtype=jnp.bfloat16, **cfg_b))
    assert out_b16.shape == (2, 1, 16, 16)
    assert jnp.allclose(out_b16, ref_b, atol=1e-1, rtol=2e-2), "B bf16 mismatch"

    # --- Config B variant: f32, forced 3 pixel tiles (halo on the VPU path).
    out_b32 = jax.block_until_ready(
        basic_conv(x_b, p_b, compute_dtype=jnp.float32, tile_pixels=128,
                   **cfg_b))
    assert jnp.allclose(out_b32, ref_b, atol=2e-3, rtol=2e-3), \
        "B f32 multi-tile mismatch"

    print("KERNEL_OK")
</pallas_src>

<mosaic_0001>
module attributes {stable_mosaic.version = 11 : i64} {
  func.func @_conv_mxu_kernel(%arg0: i32, %arg1: i32, %arg2: memref<1x1x4x422xbf16, #tpu.memory_space<vmem>>, %arg3: memref<8x36xbf16, #tpu.memory_space<vmem>>, %arg4: memref<8x1xf32, #tpu.memory_space<vmem>>, %arg5: memref<1x8x384xf32, #tpu.memory_space<vmem>>, %arg6: memref<36x384xbf16, #tpu.memory_space<vmem>>) attributes {dimension_semantics = [#tpu.dimension_semantics<parallel>, #tpu.dimension_semantics<parallel>], iteration_bounds = array<i64: 2, 1>, scalar_prefetch = 0 : i64, scratch_operands = 1 : i64, tpu.core_type = #tpu.core_type<tc>, window_params = [{transform_indices = @transform_0, window_bounds = array<i64: 1, 1, 4, 422>}, {pipeline_mode = #tpu.pipeline_mode<synchronous>, transform_indices = @transform_1, window_bounds = array<i64: 8, 36>}, {pipeline_mode = #tpu.pipeline_mode<synchronous>, transform_indices = @transform_2, window_bounds = array<i64: 8, 1>}, {transform_indices = @transform_3, window_bounds = array<i64: 1, 8, 384>}]} {
    %c0 = arith.constant 0 : index
    %c0_0 = arith.constant 0 : index
    %c0_1 = arith.constant 0 : index
    %c0_2 = arith.constant 0 : index
    %0 = vector.load %arg2[%c0, %c0_0, %c0_1, %c0_2] : memref<1x1x4x422xbf16, #tpu.memory_space<vmem>>, vector<1x1x4x384xbf16>
    %1 = vector.shape_cast %0 : vector<1x1x4x384xbf16> to vector<4x384xbf16>
    %c0_3 = arith.constant 0 : index
    %c0_4 = arith.constant 0 : index
    %2 = vector.load %arg6[%c0_3, %c0_4] : memref<36x384xbf16, #tpu.memory_space<vmem>>, vector<4x384xbf16>
    tpu.vector_store %arg6[%c0_3, %c0_4], %1 {strides = array<i32>} : memref<36x384xbf16, #tpu.memory_space<vmem>>, vector<4x384xbf16>,
    %c0_5 = arith.constant 0 : index
    %c0_6 = arith.constant 0 : index
    %c0_7 = arith.constant 0 : index
    %c1 = arith.constant 1 : index
    %3 = vector.load %arg2[%c0_5, %c0_6, %c0_7, %c1] : memref<1x1x4x422xbf16, #tpu.memory_space<vmem>>, vector<1x1x4x384xbf16>
    %4 = vector.shape_cast %3 : vector<1x1x4x384xbf16> to vector<4x384xbf16>
    %c4 = arith.constant 4 : index
    %c0_8 = arith.constant 0 : index
    %5 = vector.load %arg6[%c4, %c0_8] : memref<36x384xbf16, #tpu.memory_space<vmem>>, vector<4x384xbf16>
    tpu.vector_store %arg6[%c4, %c0_8], %4 {strides = array<i32>} : memref<36x384xbf16, #tpu.memory_space<vmem>>, vector<4x384xbf16>,
    %c0_9 = arith.constant 0 : index
    %c0_10 = arith.constant 0 : index
    %c0_11 = arith.constant 0 : index
    %c2 = arith.constant 2 : index
    %6 = vector.load %arg2[%c0_9, %c0_10, %c0_11, %c2] : memref<1x1x4x422xbf16, #tpu.memory_space<vmem>>, vector<1x1x4x384xbf16>
    %7 = vector.shape_cast %6 : vector<1x1x4x384xbf16> to vector<4x384xbf16>
    %c8 = arith.constant 8 : index
    %c0_12 = arith.constant 0 : index
    %8 = vector.load %arg6[%c8, %c0_12] : memref<36x384xbf16, #tpu.memory_space<vmem>>, vector<4x384xbf16>
    tpu.vector_store %arg6[%c8, %c0_12], %7 {strides = array<i32>} : memref<36x384xbf16, #tpu.memory_space<vmem>>, vector<4x384xbf16>,
    %c0_13 = arith.constant 0 : index
    %c0_14 = arith.constant 0 : index
    %c0_15 = arith.constant 0 : index
    %c18 = arith.constant 18 : index
    %9 = vector.load %arg2[%c0_13, %c0_14, %c0_15, %c18] : memref<1x1x4x422xbf16, #tpu.memory_space<vmem>>, vector<1x1x4x384xbf16>
    %10 = vector.shape_cast %9 : vector<1x1x4x384xbf16> to vector<4x384xbf16>
    %c12 = arith.constant 12 : index
    %c0_16 = arith.constant 0 : index
    %11 = vector.load %arg6[%c12, %c0_16] : memref<36x384xbf16, #tpu.memory_space<vmem>>, vector<4x384xbf16>
    tpu.vector_store %arg6[%c12, %c0_16], %10 {strides = array<i32>} : memref<36x384xbf16, #tpu.memory_space<vmem>>, vector<4x384xbf16>,
    %c0_17 = arith.constant 0 : index
    %c0_18 = arith.constant 0 : index
    %c0_19 = arith.constant 0 : index
    %c19 = arith.constant 19 : index
    %12 = vector.load %arg2[%c0_17, %c0_18, %c0_19, %c19] : memref<1x1x4x422xbf16, #tpu.memory_space<vmem>>, vector<1x1x4x384xbf16>
    %13 = vector.shape_cast %12 : vector<1x1x4x384xbf16> to vector<4x384xbf16>
    %c16 = arith.constant 16 : index
    %c0_20 = arith.constant 0 : index
    %14 = vector.load %arg6[%c16, %c0_20] : memref<36x384xbf16, #tpu.memory_space<vmem>>, vector<4x384xbf16>
    tpu.vector_store %arg6[%c16, %c0_20], %13 {strides = array<i32>} : memref<36x384xbf16, #tpu.memory_space<vmem>>, vector<4x384xbf16>,
    %c0_21 = arith.constant 0 : index
    %c0_22 = arith.constant 0 : index
    %c0_23 = arith.constant 0 : index
    %c20 = arith.constant 20 : index
    %15 = vector.load %arg2[%c0_21, %c0_22, %c0_23, %c20] : memref<1x1x4x422xbf16, #tpu.memory_space<vmem>>, vector<1x1x4x384xbf16>
    %16 = vector.shape_cast %15 : vector<1x1x4x384xbf16> to vector<4x384xbf16>
    %c20_24 = arith.constant 20 : index
    %c0_25 = arith.constant 0 : index
    %17 = vector.load %arg6[%c20_24, %c0_25] : memref<36x384xbf16, #tpu.memory_space<vmem>>, vector<4x384xbf16>
    tpu.vector_store %arg6[%c20_24, %c0_25], %16 {strides = array<i32>} : memref<36x384xbf16, #tpu.memory_space<vmem>>, vector<4x384xbf16>,
    %c0_26 = arith.constant 0 : index
    %c0_27 = arith.constant 0 : index
    %c0_28 = arith.constant 0 : index
    %c36 = arith.constant 36 : index
    %18 = vector.load %arg2[%c0_26, %c0_27, %c0_28, %c36] : memref<1x1x4x422xbf16, #tpu.memory_space<vmem>>, vector<1x1x4x384xbf16>
    %19 = vector.shape_cast %18 : vector<1x1x4x384xbf16> to vector<4x384xbf16>
    %c24 = arith.constant 24 : index
    %c0_29 = arith.constant 0 : index
    %20 = vector.load %arg6[%c24, %c0_29] : memref<36x384xbf16, #tpu.memory_space<vmem>>, vector<4x384xbf16>
    tpu.vector_store %arg6[%c24, %c0_29], %19 {strides = array<i32>} : memref<36x384xbf16, #tpu.memory_space<vmem>>, vector<4x384xbf16>,
    %c0_30 = arith.constant 0 : index
    %c0_31 = arith.constant 0 : index
    %c0_32 = arith.constant 0 : index
    %c37 = arith.constant 37 : index
    %21 = vector.load %arg2[%c0_30, %c0_31, %c0_32, %c37] : memref<1x1x4x422xbf16, #tpu.memory_space<vmem>>, vector<1x1x4x384xbf16>
    %22 = vector.shape_cast %21 : vector<1x1x4x384xbf16> to vector<4x384xbf16>
    %c28 = arith.constant 28 : index
    %c0_33 = arith.constant 0 : index
    %23 = vector.load %arg6[%c28, %c0_33] : memref<36x384xbf16, #tpu.memory_space<vmem>>, vector<4x384xbf16>
    tpu.vector_store %arg6[%c28, %c0_33], %22 {strides = array<i32>} : memref<36x384xbf16, #tpu.memory_space<vmem>>, vector<4x384xbf16>,
    %c0_34 = arith.constant 0 : index
    %c0_35 = arith.constant 0 : index
    %c0_36 = arith.constant 0 : index
    %c38 = arith.constant 38 : index
    %24 = vector.load %arg2[%c0_34, %c0_35, %c0_36, %c38] : memref<1x1x4x422xbf16, #tpu.memory_space<vmem>>, vector<1x1x4x384xbf16>
    %25 = vector.shape_cast %24 : vector<1x1x4x384xbf16> to vector<4x384xbf16>
    %c32 = arith.constant 32 : index
    %c0_37 = arith.constant 0 : index
    %26 = vector.load %arg6[%c32, %c0_37] : memref<36x384xbf16, #tpu.memory_space<vmem>>, vector<4x384xbf16>
    tpu.vector_store %arg6[%c32, %c0_37], %25 {strides = array<i32>} : memref<36x384xbf16, #tpu.memory_space<vmem>>, vector<4x384xbf16>,
    %c0_38 = arith.constant 0 : index
    %c0_39 = arith.constant 0 : index
    %27 = vector.load %arg3[%c0_38, %c0_39] : memref<8x36xbf16, #tpu.memory_space<vmem>>, vector<8x36xbf16>
    %c0_40 = arith.constant 0 : index
    %c0_41 = arith.constant 0 : index
    %28 = vector.load %arg6[%c0_40, %c0_41] : memref<36x384xbf16, #tpu.memory_space<vmem>>, vector<36x384xbf16>
    %cst = arith.constant dense<0.000000e+00> : vector<8x384xf32>
    %29 = tpu.matmul %27, %28, %cst {dimension_numbers = #tpu.dot_dimension_numbers<[1], [0], [0], [1], [0, 0, 1, 1], [], []>} : vector<8x36xbf16>, vector<36x384xbf16>, vector<8x384xf32> -> vector<8x384xf32>
    %c0_42 = arith.constant 0 : index
    %c0_43 = arith.constant 0 : index
    %30 = vector.load %arg4[%c0_42, %c0_43] : memref<8x1xf32, #tpu.memory_space<vmem>>, vector<8x1xf32>
    %31 = vector.broadcast %30 : vector<8x1xf32> to vector<8x384xf32>
    %32 = arith.addf %29, %31 : vector<8x384xf32>
    %cst_44 = arith.constant 0.000000e+00 : f32
    %33 = vector.broadcast %cst_44 : f32 to vector<8x384xf32>
    %34 = arith.maximumf %32, %33 : vector<8x384xf32>
    %c0_45 = arith.constant 0 : index
    %c0_46 = arith.constant 0 : index
    %c0_47 = arith.constant 0 : index
    %35 = vector.load %arg5[%c0_45, %c0_46, %c0_47] : memref<1x8x384xf32, #tpu.memory_space<vmem>>, vector<1x8x384xf32>
    %36 = vector.shape_cast %35 : vector<1x8x384xf32> to vector<8x384xf32>
    %37 = vector.shape_cast %34 : vector<8x384xf32> to vector<1x8x384xf32>
    tpu.vector_store %arg5[%c0_45, %c0_46, %c0_47], %37 {strides = array<i32>} : memref<1x8x384xf32, #tpu.memory_space<vmem>>, vector<1x8x384xf32>,
    return
  }
  func.func @transform_0(%arg0: i32, %arg1: i32) -> (i32, i32, i32, i32) {
    %c0_i32 = arith.constant 0 : i32
    %c0_i32_0 = arith.constant 0 : i32
    %c0_i32_1 = arith.constant 0 : i32
    return %arg0, %arg1, %c0_i32, %c0_i32_0 : i32, i32, i32, i32
  }
  func.func @transform_1(%arg0: i32, %arg1: i32) -> (i32, i32) {
    %c0_i32 = arith.constant 0 : i32
    %c0_i32_0 = arith.constant 0 : i32
    %c0_i32_1 = arith.constant 0 : i32
    return %c0_i32, %c0_i32_0 : i32, i32
  }
  func.func @transform_2(%arg0: i32, %arg1: i32) -> (i32, i32) {
    %c0_i32 = arith.constant 0 : i32
    %c0_i32_0 = arith.constant 0 : i32
    %c0_i32_1 = arith.constant 0 : i32
    return %c0_i32, %c0_i32_0 : i32, i32
  }
  func.func @transform_3(%arg0: i32, %arg1: i32) -> (i32, i32, i32) {
    %c0_i32 = arith.constant 0 : i32
    %c0_i32_0 = arith.constant 0 : i32
    return %arg0, %c0_i32, %arg1 : i32, i32, i32
  }
}

</mosaic_0001>

<llo_original>
// kernel: tpu_custom_call.1
$region0: #{tpu_custom_call.1}
  #allocation0 [shape = 'u32[]', space=smem, size = 0x4, offset = 0x4, fixed_abs, tag = 'smem constant byte address 0x4 - core index']
  #allocation1 [shape = 'u32[144,128]{1,0:T(1,128)}', space=vmem, size = 0x12000, scoped, tag = 'internal scratch']
  #allocation2 [shape = 'bf16[36,384]{1,0:T(8,128)(2,1)}', space=vmem, size = 0x7800, scoped, tag = 'scratch operand']
  %s0 = inlined_call_operand.hbm [shape: bf16[2,1,4,422], index: 0, kind: input, shape index: {}]
  %s1 = inlined_call_operand.vmem [shape: bf16[8,36], index: 1, kind: input, shape index: {}]
  %s2 = inlined_call_operand.vmem [shape: f32[8,1], index: 2, kind: input, shape index: {}]
  %s3 = inlined_call_operand.hbm [shape: f32[2,8,384], index: 3, kind: output, shape index: {}]
  %s4 = sld [smem:[#allocation0]]
  $region49: #{tpu_custom_call.1} parent=0
    _
  %s6 = ssub.s32 1, %s4
  %s7 = scalar_select 0, %s6, %s4
  $region1: #{tpu_custom_call.1} parent=0
    #allocation3 [shape = 'u8[8192]{0}', space=vmem, size = 0x2000, scoped, tag = 'input window, operand 0']
    #allocation4 [shape = 's32[2]{0}', space=sflag, size = 0x8, scoped, tag = 'scoped memory for tpu_custom_call.1']
    #allocation5 [shape = 's32[2]{0}', space=sflag, size = 0x8, scoped, tag = 'scoped memory for tpu_custom_call.1']
    #allocation6 [shape = 'u8[24576]{0}', space=vmem, size = 0x6000, scoped, tag = 'output window, operand 0']
    %8 = vsyncpa [#allocation4], 0
    %s9 = scalar_lea.sflag [#allocation4], 1
    %10 = vsyncpa %s9, 0
    %11 = vsyncpa [#allocation5], 0
    %s12 = scalar_lea.sflag [#allocation5], 1
    %13 = vsyncpa %s12, 0
    loop: start=0, step=1, limit=4
    $region2: #{tpu_custom_call.1} parent=1 // loop_pre_header
      _
    $region3: #{tpu_custom_call.1} parent=1 // loop_header
      %s15 = sphi 0, %s19
      %p16 = scmp.ge.s32.totalorder %s15, 4
      %s22 = sphi 0, %s34
      %s23 = sphi 0, %s30
      %s24 = sphi 0, %s22
      %s25 = sphi 0, %s23
      %s26 = sphi 0, %s24
      %s27 = sphi 0, %s25
      %s39 = sphi 0, %s41
      %s42 = sphi 0, %s39
      %s43 = sphi 0, %s42
      %s59 = sphi 0, %s43
      %s63 = sphi 0, %s63
      %s65 = sphi 0, %s63
      %s66 = sphi 0, %s65
      %s80 = sphi 0, %s66
      %s84 = sphi 0, %s84
      %s86 = sphi 0, %s84
      %s87 = sphi 0, %s86
      %s101 = sphi 0, %s87
      %s109 = sphi 0, %s111
      %s112 = sphi 0, %s109
      %s113 = sphi 0, %s112
      %s129 = sphi 0, %s113
    $region4: #{tpu_custom_call.1} parent=1 // loop_header_branch
      %18 = sbr.rel (%p16) target = $region8
    $region5: #{tpu_custom_call.1} parent=1 // loop_body
      %s20 = ssub.s32 %s15, 1
      %s21 = ssub.s32 %s15, 2
      %s28 = sadd.s32 1, %s23
      %p29 = scmp.ge.s32.totalorder %s28, 1
      %s30 = scalar_select %p29, 0, %s28
      %s31 = sadd.s32 1, %s22
      %s32 = scalar_select %p29, %s31, %s22
      %p33 = scmp.ge.s32.totalorder %s32, 2
      %s34 = scalar_select %p33, 0, %s32
      %s35 = ssub.s32 %s22, %s34
      %s36 = ssub.s32 %s23, %s30
      %s37 = sor.u32 %s35, %s36
      %p38 = scmp.eq.s32.totalorder %s37, 0
      %s40 = sadd.s32 %s39, 1
      %s41 = scalar_select %p38, %s39, %s40
      %p44 = pneg %p38
      %p45 = scmp.eq.s32.totalorder %s15, 1
      %p46 = por %p44, %p45
      %p47 = scmp.ne.s32.totalorder %s39, %s42
      %p48 = scmp.eq.s32.totalorder %s15, 0
      %p49 = por %p47, %p48
      %p50 = scmp.ne.s32.totalorder %s39, %s42
      %p51 = scmp.eq.s32.totalorder %s20, 1
      %p52 = por %p50, %p51
      %p53 = scmp.ne.s32.totalorder %s42, %s43
      %p54 = scmp.eq.s32.totalorder %s20, 0
      %p55 = por %p53, %p54
      %p56 = scmp.ne.s32.totalorder %s42, %s43
      %p57 = scmp.eq.s32.totalorder %s21, 1
      %p58 = por %p56, %p57
      %p60 = scmp.ne.s32.totalorder %s43, %s59
      %p61 = scmp.eq.s32.totalorder %s21, 0
      %p62 = por %p60, %p61
      %s64 = sadd.s32 %s63, 1
      %p67 = scmp.eq.s32.totalorder %s15, 1
      %p68 = scmp.ne.s32.totalorder %s63, %s65
      %p69 = scmp.eq.s32.totalorder %s15, 0
      %p70 = por %p68, %p69
      %p71 = scmp.ne.s32.totalorder %s63, %s65
      %p72 = scmp.eq.s32.totalorder %s20, 1
      %p73 = por %p71, %p72
      %p74 = scmp.ne.s32.totalorder %s65, %s66
      %p75 = scmp.eq.s32.totalorder %s20, 0
      %p76 = por %p74, %p75
      %p77 = scmp.ne.s32.totalorder %s65, %s66
      %p78 = scmp.eq.s32.totalorder %s21, 1
      %p79 = por %p77, %p78
      %p81 = scmp.ne.s32.totalorder %s66, %s80
      %p82 = scmp.eq.s32.totalorder %s21, 0
      %p83 = por %p81, %p82
      %s85 = sadd.s32 %s84, 1
      %p88 = scmp.eq.s32.totalorder %s15, 1
      %p89 = scmp.ne.s32.totalorder %s84, %s86
      %p90 = scmp.eq.s32.totalorder %s15, 0
      %p91 = por %p89, %p90
      %p92 = scmp.ne.s32.totalorder %s84, %s86
      %p93 = scmp.eq.s32.totalorder %s20, 1
      %p94 = por %p92, %p93
      %p95 = scmp.ne.s32.totalorder %s86, %s87
      %p96 = scmp.eq.s32.totalorder %s20, 0
      %p97 = por %p95, %p96
      %p98 = scmp.ne.s32.totalorder %s86, %s87
      %p99 = scmp.eq.s32.totalorder %s21, 1
      %p100 = por %p98, %p99
      %p102 = scmp.ne.s32.totalorder %s87, %s101
      %p103 = scmp.eq.s32.totalorder %s21, 0
      %p104 = por %p102, %p103
      %s105 = ssub.s32 %s22, %s34
      %s106 = ssub.s32 %s23, %s30
      %s107 = sor.u32 %s105, %s106
      %p108 = scmp.eq.s32.totalorder %s107, 0
      %s110 = sadd.s32 %s109, 1
      %s111 = scalar_select %p108, %s109, %s110
      %p114 = pneg %p108
      %p115 = scmp.eq.s32.totalorder %s15, 1
      %p116 = por %p114, %p115
      %p117 = scmp.ne.s32.totalorder %s109, %s112
      %p118 = scmp.eq.s32.totalorder %s15, 0
      %p119 = por %p117, %p118
      %p120 = scmp.ne.s32.totalorder %s109, %s112
      %p121 = scmp.eq.s32.totalorder %s20, 1
      %p122 = por %p120, %p121
      %p123 = scmp.ne.s32.totalorder %s112, %s113
      %p124 = scmp.eq.s32.totalorder %s20, 0
      %p125 = por %p123, %p124
      %p126 = scmp.ne.s32.totalorder %s112, %s113
      %p127 = scmp.eq.s32.totalorder %s21, 1
      %p128 = por %p126, %p127
      %p130 = scmp.ne.s32.totalorder %s113, %s129
      %p131 = scmp.eq.s32.totalorder %s21, 0
      %p132 = por %p130, %p131
      %p133 = scmp.le.s32.totalorder 1, %s15
      %p134 = scmp.lt.s32.totalorder %s15, 3
      %p135 = pnand %p133, %p134
      %p136 = pneg %p135
      // Predicated region
      $region9: #{tpu_custom_call.1} parent=5 // pred_check
        _
      $region10: #{tpu_custom_call.1} parent=5 // pred_check_branch
        %138 = sbr.rel (%p135) target = $region12
      $region11: #{tpu_custom_call.1} parent=5 // pred_region
        %s139 = ssub.s32 %s15, 1
        // Predicated region
        $region13: #{tpu_custom_call.1} parent=11 // pred_check
          %p140 = pneg %p76
        $region14: #{tpu_custom_call.1} parent=11 // pred_check_branch
          %142 = sbr.rel (%p140) target = $region16
        $region15: #{tpu_custom_call.1} parent=11 // pred_region
          _
        $region16: #{tpu_custom_call.1} parent=11 // pred_fallthru
          _
        // Predicated region
        $region17: #{tpu_custom_call.1} parent=11 // pred_check
          %p143 = pneg %p97
        $region18: #{tpu_custom_call.1} parent=11 // pred_check_branch
          %145 = sbr.rel (%p143) target = $region20
        $region19: #{tpu_custom_call.1} parent=11 // pred_region
          _
        $region20: #{tpu_custom_call.1} parent=11 // pred_fallthru
          _
      $region12: #{tpu_custom_call.1} parent=5 // pred_fallthru
        _
      %p146 = scmp.lt.s32.totalorder %s15, 2
      // Predicated region
      $region21: #{tpu_custom_call.1} parent=5 // pred_check
        %p147 = pneg %p146
      $region22: #{tpu_custom_call.1} parent=5 // pred_check_branch
        %149 = sbr.rel (%p147) target = $region24
      $region23: #{tpu_custom_call.1} parent=5 // pred_region
        // Predicated region
        $region25: #{tpu_custom_call.1} parent=23 // pred_check
          %p150 = pneg %p49
        $region26: #{tpu_custom_call.1} parent=23 // pred_check_branch
          %152 = sbr.rel (%p150) target = $region28
        $region27: #{tpu_custom_call.1} parent=23 // pred_region
          %s153 = sand.u32 %s39, 1
          %s154 = scalar_lea.sflag [#allocation4], %s153
          %s155 = sand.u32 %s39, 1
          %s156 = smul.addr %s155, 8
          %s157 = scalar_lea.vmem [#allocation3], %s156
          %s159 = ssub.s32 128, 128
          %160 = vsyncadd %s154, %s159
          %s161 = smul.addr %s23, 4
          %s162 = smul.addr %s22, 4
          %s163 = sadd.s32 %s161, %s162
          %s164 = smul.addr %s163, 32
          %s165 = scalar_lea.hbm %s0, %s164
          %s167 = sshll.u32 %s157, 4
          %s168 = int_to_ptr.vmem [resolvable:$true] %s167
          %170 = dma.hbm_to_vmem [thread:$0]  %s165, 128, %s168, %s154
        $region28: #{tpu_custom_call.1} parent=23 // pred_fallthru
          _
      $region24: #{tpu_custom_call.1} parent=5 // pred_fallthru
        _
      %p171 = scmp.le.s32.totalorder 1, %s15
      %p172 = scmp.lt.s32.totalorder %s15, 3
      %p173 = pnand %p171, %p172
      %p174 = pneg %p173
      // Predicated region
      $region29: #{tpu_custom_call.1} parent=5 // pred_check
        _
      $region30: #{tpu_custom_call.1} parent=5 // pred_check_branch
        %176 = sbr.rel (%p173) target = $region32
      $region31: #{tpu_custom_call.1} parent=5 // pred_region
        %s177 = ssub.s32 %s15, 1
        %s178 = sand.u32 %s42, 1
        %s179 = scalar_lea.sflag [#allocation4], %s178
        %s180 = sand.u32 %s42, 1
        %s181 = smul.addr %s180, 8
        %s182 = scalar_lea.vmem [#allocation3], %s181
        // Predicated region
        $region33: #{tpu_custom_call.1} parent=31 // pred_check
          %p183 = pneg %p55
        $region34: #{tpu_custom_call.1} parent=31 // pred_check_branch
          %185 = sbr.rel (%p183) target = $region36
        $region35: #{tpu_custom_call.1} parent=31 // pred_region
          %186 = dma.done %s179, 128
        $region36: #{tpu_custom_call.1} parent=31 // pred_fallthru
          _
        %s187 = sand.u32 %s42, 1
        %s188 = scalar_lea.sflag [#allocation4], %s187
        %s189 = sand.u32 %s42, 1
        %s190 = smul.addr %s189, 8
        %s191 = scalar_lea.vmem [#allocation3], %s190
        %p192 = pneg %p55
        %p193 = pneg %p52
        %p194 = pneg %p76
        %p195 = pneg %p73
        %p196 = pneg %p97
        %p197 = pneg %p94
        %p198 = pneg %p125
        %p199 = pneg %p122
        %s200 = sand.u32 %s112, 1
        %s201 = scalar_lea.sflag [#allocation5], %s200
        %s202 = sand.u32 %s112, 1
        %s203 = smul.addr %s202, 24
        %s204 = scalar_lea.vmem [#allocation6], %s203
        %s205 = smul.u32 3, %s25
        %v207 = vld [vmem:[%s182] sm:$0x3f]
        %v209 = vcombine.high %v207, %v207
        %v211 = vunpack.c.l.s4 1983009808
        %v212 = vunpack.c.0.s8 %v211
        %v213 = vlaneseq
        %v214 = vshrl.u32 %v213, 7
        %v215 = vsub.s32 %v212, %v214
        %v216 = vrot.slane %v207, %v215
        %v218 = vunpack.c.l.s4 1983009808
        %v219 = vunpack.c.0.s8 %v218
        %v220 = vlaneseq
        %v221 = vshrl.u32 %v220, 7
        %v222 = vsub.s32 %v219, %v221
        %v223 = vrot.slane %v209, %v222
        %226 = vst [vmem:[#allocation2] sm:$0x33] %v216
        %227 = vst [vmem:[#allocation2 + $0x8] sm:$0x3] %v223
        %v228 = vld [vmem:[%s182] sm:$0xff]
        %v230 = vcombine.low %v228, %v228
        %v232 = vunpack.c.l.s4 1983009808
        %v233 = vunpack.c.0.s8 %v232
        %v234 = vlaneseq
        %v235 = vshrl.u32 %v234, 7
        %v236 = vsub.s32 %v233, %v235
        %v237 = vrot.slane %v230, %v236
        %v239 = vunpack.c.l.s4 1983009808
        %v240 = vunpack.c.0.s8 %v239
        %v241 = vlaneseq
        %v242 = vshrl.u32 %v241, 7
        %v243 = vsub.s32 %v240, %v242
        %v244 = vrot.slane %v228, %v243
        %245 = vrot.lane.b32.xlu0 %v237, 127
        %v246 = vpop.permute.xlu0 %245
        %247 = vrot.lane.b32.xlu0 %v244, 127
        %v248 = vpop.permute.xlu0 %247
        %v249 = vrot.slane %v246, 4
        %v250 = vrot.slane %v248, 4
        %vm251 = vcmask 1043456
        %v252 = vsel %vm251, %v249, %v250
        %vm253 = vcmask 1039360
        %v254 = vsel %vm253, %v246, %v252
        %v255 = vsel %vm253, %v248, %v250
        %258 = vst [vmem:[#allocation2] sm:$0xcc] %v254
        %259 = vst [vmem:[#allocation2 + $0x8] sm:$0xc] %v255
        %v260 = vld [vmem:[%s182] sm:$0xff]
        %v262 = vcombine.high %v260, %v260
        %v264 = vunpack.c.l.s4 1983009808
        %v265 = vunpack.c.0.s8 %v264
        %v266 = vlaneseq
        %v267 = vshrl.u32 %v266, 7
        %v268 = vsub.s32 %v265, %v267
        %v269 = vrot.slane %v260, %v268
        %v271 = vunpack.c.l.s4 1983009808
        %v272 = vunpack.c.0.s8 %v271
        %v273 = vlaneseq
        %v274 = vshrl.u32 %v273, 7
        %v275 = vsub.s32 %v272, %v274
        %v276 = vrot.slane %v262, %v275
        %277 = vrot.lane.b32.xlu0 %v269, 126
        %v278 = vpop.permute.xlu0 %277
        %279 = vrot.lane.b32.xlu0 %v276, 126
        %v280 = vpop.permute.xlu0 %279
        %v281 = vrot.slane %v278, 4
        %v282 = vrot.slane %v280, 4
        %v283 = vsel %vm251, %v281, %v282
        %vm284 = vcmask 1031168
        %v285 = vsel %vm284, %v278, %v283
        %v286 = vsel %vm284, %v280, %v282
        %289 = vst [vmem:[#allocation2 + $0xc] sm:$0x33] %v285
        %290 = vst [vmem:[#allocation2 + $0x14] sm:$0x3] %v286
        %v291 = vld [vmem:[%s182] sm:$0xff]
        %v293 = vcombine.low %v291, %v291
        %v295 = vunpack.c.l.s4 1983009808
        %v296 = vunpack.c.0.s8 %v295
        %v297 = vlaneseq
        %v298 = vshrl.u32 %v297, 7
        %v299 = vsub.s32 %v296, %v298
        %v300 = vrot.slane %v293, %v299
        %v302 = vunpack.c.l.s4 1983009808
        %v303 = vunpack.c.0.s8 %v302
        %v304 = vlaneseq
        %v305 = vshrl.u32 %v304, 7
        %v306 = vsub.s32 %v303, %v305
        %v307 = vrot.slane %v291, %v306
        %308 = vrot.lane.b32.xlu0 %v300, 110
        %v309 = vpop.permute.xlu0 %308
        %310 = vrot.lane.b32.xlu0 %v307, 110
        %v311 = vpop.permute.xlu0 %310
        %v312 = vrot.slane %v309, 4
        %v313 = vrot.slane %v311, 4
        %v314 = vsel %vm251, %v312, %v313
        %vm315 = vcmask 900096
        %v316 = vsel %vm315, %v309, %v314
        %v317 = vsel %vm315, %v311, %v313
        %320 = vst [vmem:[#allocation2 + $0xc] sm:$0xcc] %v316
        %321 = vst [vmem:[#allocation2 + $0x14] sm:$0xc] %v317
        %v322 = vld [vmem:[%s182] sm:$0xff]
        %v324 = vcombine.high %v322, %v322
        %v326 = vunpack.c.l.s4 1983009808
        %v327 = vunpack.c.0.s8 %v326
        %v328 = vlaneseq
        %v329 = vshrl.u32 %v328, 7
        %v330 = vsub.s32 %v327, %v329
        %v331 = vrot.slane %v322, %v330
        %v333 = vunpack.c.l.s4 1983009808
        %v334 = vunpack.c.0.s8 %v333
        %v335 = vlaneseq
        %v336 = vshrl.u32 %v335, 7
        %v337 = vsub.s32 %v334, %v336
        %v338 = vrot.slane %v324, %v337
        %339 = vrot.lane.b32.xlu0 %v331, 109
        %v340 = vpop.permute.xlu0 %339
        %341 = vrot.lane.b32.xlu0 %v338, 109
        %v342 = vpop.permute.xlu0 %341
        %v343 = vrot.slane %v340, 4
        %v344 = vrot.slane %v342, 4
        %v345 = vsel %vm251, %v343, %v344
        %vm346 = vcmask 891904
        %v347 = vsel %vm346, %v340, %v345
        %v348 = vsel %vm346, %v342, %v344
        %351 = vst [vmem:[#allocation2 + $0x18] sm:$0x33] %v347
        %352 = vst [vmem:[#allocation2 + $0x20] sm:$0x3] %v348
        %v353 = vld [vmem:[%s182] sm:$0xff]
        %v355 = vcombine.low %v353, %v353
        %v357 = vunpack.c.l.s4 1983009808
        %v358 = vunpack.c.0.s8 %v357
        %v359 = vlaneseq
        %v360 = vshrl.u32 %v359, 7
        %v361 = vsub.s32 %v358, %v360
        %v362 = vrot.slane %v355, %v361
        %v364 = vunpack.c.l.s4 1983009808
        %v365 = vunpack.c.0.s8 %v364
        %v366 = vlaneseq
        %v367 = vshrl.u32 %v366, 7
        %v368 = vsub.s32 %v365, %v367
        %v369 = vrot.slane %v353, %v368
        %370 = vrot.lane.b32.xlu0 %v362, 108
        %v371 = vpop.permute.xlu0 %370
        %372 = vrot.lane.b32.xlu0 %v369, 108
        %v373 = vpop.permute.xlu0 %372
        %v374 = vrot.slane %v371, 4
        %v375 = vrot.slane %v373, 4
        %v376 = vsel %vm251, %v374, %v375
        %vm377 = vcmask 883712
        %v378 = vsel %vm377, %v371, %v376
        %v379 = vsel %vm377, %v373, %v375
        %382 = vst [vmem:[#allocation2 + $0x18] sm:$0xcc] %v378
        %383 = vst [vmem:[#allocation2 + $0x20] sm:$0xc] %v379
        %v384 = vld [vmem:[%s182] sm:$0xff]
        %v386 = vcombine.high %v384, %v384
        %v388 = vunpack.c.l.s4 1983009808
        %v389 = vunpack.c.0.s8 %v388
        %v390 = vlaneseq
        %v391 = vshrl.u32 %v390, 7
        %v392 = vsub.s32 %v389, %v391
        %v393 = vrot.slane %v384, %v392
        %v395 = vunpack.c.l.s4 1983009808
        %v396 = vunpack.c.0.s8 %v395
        %v397 = vlaneseq
        %v398 = vshrl.u32 %v397, 7
        %v399 = vsub.s32 %v396, %v398
        %v400 = vrot.slane %v386, %v399
        %401 = vrot.lane.b32.xlu0 %v393, 92
        %v402 = vpop.permute.xlu0 %401
        %403 = vrot.lane.b32.xlu0 %v400, 92
        %v404 = vpop.permute.xlu0 %403
        %v405 = vrot.slane %v402, 4
        %v406 = vrot.slane %v404, 4
        %v407 = vsel %vm251, %v405, %v406
        %vm408 = vcmask 752640
        %v409 = vsel %vm408, %v402, %v407
        %v410 = vsel %vm408, %v404, %v406
        %413 = vst [vmem:[#allocation2 + $0x24] sm:$0x33] %v409
        %414 = vst [vmem:[#allocation2 + $0x2c] sm:$0x3] %v410
        %v415 = vld [vmem:[%s182] sm:$0xff]
        %v417 = vcombine.low %v415, %v415
        %v419 = vunpack.c.l.s4 1983009808
        %v420 = vunpack.c.0.s8 %v419
        %v421 = vlaneseq
        %v422 = vshrl.u32 %v421, 7
        %v423 = vsub.s32 %v420, %v422
        %v424 = vrot.slane %v417, %v423
        %v426 = vunpack.c.l.s4 1983009808
        %v427 = vunpack.c.0.s8 %v426
        %v428 = vlaneseq
        %v429 = vshrl.u32 %v428, 7
        %v430 = vsub.s32 %v427, %v429
        %v431 = vrot.slane %v415, %v430
        %432 = vrot.lane.b32.xlu0 %v424, 91
        %v433 = vpop.permute.xlu0 %432
        %434 = vrot.lane.b32.xlu0 %v431, 91
        %v435 = vpop.permute.xlu0 %434
        %v436 = vrot.slane %v433, 4
        %v437 = vrot.slane %v435, 4
        %v438 = vsel %vm251, %v436, %v437
        %vm439 = vcmask 744448
        %v440 = vsel %vm439, %v433, %v438
        %v441 = vsel %vm439, %v435, %v437
        %444 = vst [vmem:[#allocation2 + $0x24] sm:$0xcc] %v440
        %445 = vst [vmem:[#allocation2 + $0x2c] sm:$0xc] %v441
        %v446 = vld [vmem:[%s182] sm:$0xff]
        %v448 = vcombine.high %v446, %v446
        %v450 = vunpack.c.l.s4 1983009808
        %v451 = vunpack.c.0.s8 %v450
        %v452 = vlaneseq
        %v453 = vshrl.u32 %v452, 7
        %v454 = vsub.s32 %v451, %v453
        %v455 = vrot.slane %v446, %v454
        %v457 = vunpack.c.l.s4 1983009808
        %v458 = vunpack.c.0.s8 %v457
        %v459 = vlaneseq
        %v460 = vshrl.u32 %v459, 7
        %v461 = vsub.s32 %v458, %v460
        %v462 = vrot.slane %v448, %v461
        %463 = vrot.lane.b32.xlu0 %v455, 90
        %v464 = vpop.permute.xlu0 %463
        %465 = vrot.lane.b32.xlu0 %v462, 90
        %v466 = vpop.permute.xlu0 %465
        %v467 = vrot.slane %v464, 4
        %v468 = vrot.slane %v466, 4
        %v469 = vsel %vm251, %v467, %v468
        %vm470 = vcmask 736256
        %v471 = vsel %vm470, %v464, %v469
        %v472 = vsel %vm470, %v466, %v468
        %475 = vst [vmem:[#allocation2 + $0x30] sm:$0x33] %v471
        %476 = vst [vmem:[#allocation2 + $0x38] sm:$0x3] %v472
        %v477 = vld [vmem:[%s1] sm:$0xf]
        %v478 = vld [vmem:[#allocation2] sm:$0xff]
        %v479 = vld [vmem:[#allocation2 + $0x8] sm:$0xf]
        %v480 = vld [vmem:[#allocation2 + $0xc] sm:$0xff]
        %v481 = vld [vmem:[#allocation2 + $0x14] sm:$0xf]
        %v482 = vld [vmem:[#allocation2 + $0x18] sm:$0xff]
        %v483 = vld [vmem:[#allocation2 + $0x20] sm:$0xf]
        %v484 = vld [vmem:[#allocation2 + $0x24] sm:$0xff]
        %v485 = vld [vmem:[#allocation2 + $0x2c] sm:$0xf]
        %v486 = vld [vmem:[#allocation2 + $0x30] sm:$0x33]
        %v487 = vld [vmem:[#allocation2 + $0x38] sm:$0x3]
        %v488 = vld [vmem:[%s2] sm:$0xff]
        %490 = vset.pattern.permute.xlu0 0
        %491 = vperm.xlu0 %490, %v488
        %v492 = vpop.permute.xlu0 %491
        %v504 = vunpack.c.l.b16 %v478
        %v505 = vunpack.c.h.b16 %v478
        %v506 = vunpack.c.l.b16 %v479
        %v507 = vunpack.c.l.b16 %v480
        %v508 = vunpack.c.h.b16 %v480
        %v509 = vunpack.c.l.b16 %v481
        %v510 = vunpack.c.l.b16 %v482
        %v511 = vunpack.c.h.b16 %v482
        %v512 = vunpack.c.l.b16 %v483
        %v513 = vunpack.c.l.b16 %v484
        %v514 = vunpack.c.h.b16 %v484
        %v515 = vunpack.c.l.b16 %v485
        %v516 = vunpack.c.l.b16 %v486
        %v517 = vunpack.c.h.b16 %v486
        %v518 = vunpack.c.l.b16 %v487
        %v519 = vpack.c.b16 %v507, %v504
        %v520 = vpack.c.b16 %v508, %v505
        %v521 = vpack.c.b16 %v509, %v506
        %v522 = vpack.c.b16 %v513, %v510
        %v523 = vpack.c.b16 %v514, %v511
        %v524 = vpack.c.b16 %v515, %v512
        %v525 = vpack.c.b16 %v516, %v516
        %v526 = vpack.c.b16 %v517, %v517
        %v527 = vpack.c.b16 %v518, %v518
        %vm534 = vcmask 293888
        %v536 = vsel %vm534, %v477, 0
        %vm538 = vcmask 1041408
        %v540 = vsel %vm538, %v525, 0
        %v543 = vsel %vm538, %v526, 0
        %v546 = vsel %vm538, %v527, 0
        %548 = vmatprep.subr.bf16.mxu0 %v520
        %549 = vmatpush1.bf16.msra.mxu0 %v519
        %550 = vmatprep.subr.bf16.mxu0 %v523
        %551 = vmatpush1.bf16.msra.mxu0 %v522
        %552 = vmatprep.subr.bf16.mxu0 %v543
        %553 = vmatpush1.bf16.msra.mxu0 %v540
        %554 = vmatprep.subr.bf16.mxu0 0
        %555 = vmatpush1.bf16.msra.mxu0 0
        %556 = vmatprep.subr.bf16.mxu0 0
        %557 = vmatpush1.bf16.msra.mxu0 0
        %558 = vmatprep.subr.bf16.mxu0 0
        %559 = vmatpush1.bf16.msra.mxu0 0
        %560 = vmatprep.subr.bf16.mxu0 0
        %561 = vmatpush1.bf16.msra.mxu0 0
        %562 = vmatprep.subr.bf16.mxu0 0
        %563 = vmatpush1.bf16.msra.mxu0 0
        %564 = vmatprep.subr.bf16.mxu0 0
        %565 = vmatpush1.bf16.msra.mxu0 0
        %566 = vmatprep.subr.bf16.mxu0 0
        %567 = vmatpush1.bf16.msra.mxu0 0
        %568 = vmatprep.subr.bf16.mxu0 0
        %569 = vmatpush1.bf16.msra.mxu0 0
        %570 = vmatprep.subr.bf16.mxu0 0
        %571 = vmatpush1.bf16.msra.mxu0 0
        %572 = vmatprep.subr.bf16.mxu0 0
        %573 = vmatpush1.bf16.msra.mxu0 0
        %574 = vmatprep.subr.bf16.mxu0 0
        %575 = vmatpush1.bf16.msra.mxu0 0
        %576 = vmatprep.subr.bf16.mxu0 0
        %577 = vmatpush1.bf16.msra.mxu0 0
        %578 = vmatprep.subr.bf16.mxu0 0
        %579 = vmatpush1.bf16.msra.mxu0 0
        %580 = vmatprep.mubr.bf16.mxu0 0
        %581 = vmatmul.mubr.bf16.gmra.mrb[0].mxu0 %v536
        %v582 = vpop.f32.mrb[0].mxu0
        %v583 = vadd.f32 %v492, %v582
        %v584 = vpop.f32.mrb[0].mxu0
        %v585 = vadd.f32 %v492, %v584
        %v586 = vpop.f32.mrb[0].mxu0
        %v587 = vpop.f32.mrb[0].mxu0
        %588 = vdwg.mxu0
        %589 = vmatprep.subr.bf16.mxu0 0
        %590 = vmatpush1.bf16.msra.mxu0 %v521
        %591 = vmatprep.subr.bf16.mxu0 0
        %592 = vmatpush1.bf16.msra.mxu0 %v524
        %593 = vmatprep.subr.bf16.mxu0 0
        %594 = vmatpush1.bf16.msra.mxu0 %v546
        %595 = vmatprep.subr.bf16.mxu0 0
        %596 = vmatpush1.bf16.msra.mxu0 0
        %597 = vmatprep.subr.bf16.mxu0 0
        %598 = vmatpush1.bf16.msra.mxu0 0
        %599 = vmatprep.subr.bf16.mxu0 0
        %600 = vmatpush1.bf16.msra.mxu0 0
        %601 = vmatprep.subr.bf16.mxu0 0
        %602 = vmatpush1.bf16.msra.mxu0 0
        %603 = vmatprep.subr.bf16.mxu0 0
        %604 = vmatpush1.bf16.msra.mxu0 0
        %605 = vmatprep.subr.bf16.mxu0 0
        %606 = vmatpush1.bf16.msra.mxu0 0
        %607 = vmatprep.subr.bf16.mxu0 0
        %608 = vmatpush1.bf16.msra.mxu0 0
        %609 = vmatprep.subr.bf16.mxu0 0
        %610 = vmatpush1.bf16.msra.mxu0 0
        %611 = vmatprep.subr.bf16.mxu0 0
        %612 = vmatpush1.bf16.msra.mxu0 0
        %613 = vmatprep.subr.bf16.mxu0 0
        %614 = vmatpush1.bf16.msra.mxu0 0
        %615 = vmatprep.subr.bf16.mxu0 0
        %616 = vmatpush1.bf16.msra.mxu0 0
        %617 = vmatprep.subr.bf16.mxu0 0
        %618 = vmatpush1.bf16.msra.mxu0 0
        %619 = vmatprep.subr.bf16.mxu0 0
        %620 = vmatpush1.bf16.msra.mxu0 0
        %621 = vmatprep.mubr.bf16.mxu0 0
        %622 = vmatmul.mubr.bf16.gmra.mrb[0].mxu0 %v536
        %v623 = vpop.f32.mrb[0].mxu0
        %v624 = vadd.f32 %v492, %v623
        %v625 = vpop.f32.mrb[0].mxu0
        %v626 = vpop.f32.mrb[0].mxu0
        %v627 = vpop.f32.mrb[0].mxu0
        %628 = vdwg.mxu0
        %v629 = vmax.f32 %v583, 0.0
        %v630 = vmax.f32 %v585, 0.0
        %v631 = vmax.f32 %v624, 0.0
        %632 = vst [vmem:[%s204] sm:$0xff] %v629
        %633 = vst [vmem:[%s204 + $0x8] sm:$0xff] %v630
        %634 = vst [vmem:[%s204 + $0x10] sm:$0xff] %v631
        %s635 = sand.u32 %s112, 1
        %s636 = scalar_lea.sflag [#allocation5], %s635
        %s637 = sand.u32 %s112, 1
        %s638 = smul.addr %s637, 24
        %s639 = scalar_lea.vmem [#allocation6], %s638
        // Predicated region
        $region37: #{tpu_custom_call.1} parent=31 // pred_check
          %p640 = pneg %p122
        $region38: #{tpu_custom_call.1} parent=31 // pred_check_branch
          %642 = sbr.rel (%p640) target = $region40
        $region39: #{tpu_custom_call.1} parent=31 // pred_region
          %s643 = smul.u32 3, %s25
          %s645 = ssub.s32 384, 384
          %646 = vsyncadd %s636, %s645
          %s647 = smul.addr %s24, 3
          %s648 = sadd.s32 %s643, %s647
          %s649 = smul.addr %s648, 128
          %s650 = scalar_lea.hbm %s3, %s649
          %s652 = sshll.u32 %s639, 4
          %s653 = int_to_ptr.vmem [resolvable:$true] %s652
          %655 = dma.vmem_to_hbm [thread:$0]  %s653, 384, %s650, %s636
        $region40: #{tpu_custom_call.1} parent=31 // pred_fallthru
          _
      $region32: #{tpu_custom_call.1} parent=5 // pred_fallthru
        _
      %p656 = scmp.le.s32.totalorder 2, %s15
      // Predicated region
      $region41: #{tpu_custom_call.1} parent=5 // pred_check
        %p657 = pneg %p656
      $region42: #{tpu_custom_call.1} parent=5 // pred_check_branch
        %659 = sbr.rel (%p657) target = $region44
      $region43: #{tpu_custom_call.1} parent=5 // pred_region
        %s660 = ssub.s32 %s15, 2
        // Predicated region
        $region45: #{tpu_custom_call.1} parent=43 // pred_check
          %p661 = pneg %p128
        $region46: #{tpu_custom_call.1} parent=43 // pred_check_branch
          %663 = sbr.rel (%p661) target = $region48
        $region47: #{tpu_custom_call.1} parent=43 // pred_region
          %s664 = sand.u32 %s113, 1
          %s665 = scalar_lea.sflag [#allocation5], %s664
          %s666 = sand.u32 %s113, 1
          %s667 = smul.addr %s666, 24
          %s668 = scalar_lea.vmem [#allocation6], %s667
          %669 = dma.done %s665, 384
        $region48: #{tpu_custom_call.1} parent=43 // pred_fallthru
          _
      $region44: #{tpu_custom_call.1} parent=5 // pred_fallthru
        _
    $region6: #{tpu_custom_call.1} parent=1 // loop_footer
      %s19 = sadd.s32 1, %s15
    $region7: #{tpu_custom_call.1} parent=1 // loop_footer_branch
      %14 = sbr.rel target = $region3
    $region8: #{tpu_custom_call.1} parent=1 // loop_exit
      _
    %670 = vsyncpa [#allocation4], 1
    %s671 = scalar_lea.sflag [#allocation4], 1
    %672 = vsyncpa %s671, 1
    %673 = vsyncpa [#allocation5], 1
    %s674 = scalar_lea.sflag [#allocation5], 1
    %675 = vsyncpa %s674, 1

</llo_original>
